<compile_context>
chip_gen: v7x
topology: tpu7x:2x2x1
jax: 0.10.0
libtpu: 0.0.40
codegen_flags: <defaults>
</compile_context>

<pallas_src>
import math

import jax
import jax.numpy as jnp
from jax.experimental import pallas as pl
from jax.experimental.pallas import tpu as pltpu

_LANE = 128

# v7x-safe defaults (64 MiB physical VMEM): 32 MiB scoped limit, 6 MiB blocks
# -> in+out double-buffered = 24 MiB.  Used when introspection is unavailable.
_DEFAULT_VMEM_LIMIT = 32 * 1024 * 1024
_DEFAULT_MAX_BLOCK = 6 * 1024 * 1024


def _copy_kernel(x_ref, o_ref):
    # Identity copy of the current tile -- the entire "compute" of a flatten.
    o_ref[...] = x_ref[...]


def _tpu_budgets():
    """Generation-dependent (scoped-VMEM limit, per-block byte cap)."""
    vmem_limit, max_block = _DEFAULT_VMEM_LIMIT, _DEFAULT_MAX_BLOCK
    try:
        cap = pltpu.get_tpu_info().vmem_capacity_bytes
        if cap >= 128 * 1024 * 1024:
            # v5e / v6e: 128 MiB physical VMEM -> bigger scoped limit + blocks.
            vmem_limit, max_block = 64 * 1024 * 1024, 8 * 1024 * 1024
    except Exception:
        pass  # keep conservative (v7x-safe) defaults
    return vmem_limit, max_block


def _pallas_identity_copy(x2d, grid, block, index_map, semantics, n_bytes,
                          vmem_limit):
    return pl.pallas_call(
        _copy_kernel,
        out_shape=jax.ShapeDtypeStruct(x2d.shape, x2d.dtype),
        grid_spec=pltpu.PrefetchScalarGridSpec(
            num_scalar_prefetch=0,
            grid=grid,
            in_specs=[pl.BlockSpec(block, index_map)],
            out_specs=pl.BlockSpec(block, index_map),
        ),
        compiler_params=pltpu.CompilerParams(
            dimension_semantics=semantics,
            vmem_limit_bytes=vmem_limit,
        ),
        cost_estimate=pl.CostEstimate(
            flops=0, transcendentals=0, bytes_accessed=2 * n_bytes),
    )(x2d)


def flatten_layer(x: jax.Array, *, materialize: bool = False) -> jax.Array:
    """FlattenLayer.forward: (B, ...) -> (B, prod(...)).

    Default (materialize=False) is the production choice: flatten has no data
    movement of its own, so it is a free metadata reshape.  materialize=True
    streams the flattened buffer through a Pallas identity-copy kernel with
    bandwidth-friendly blocking (benchmark / explicit-copy path only).
    """
    b = x.shape[0]
    d = math.prod(x.shape[1:]) if x.ndim > 1 else 1
    x2 = jnp.reshape(x, (b, d))          # metadata-only, row-major == torch .view
    if not materialize:
        return x2

    itemsize = jnp.dtype(x.dtype).itemsize
    n = b * d
    n_bytes = n * itemsize
    vmem_limit, max_block = _tpu_budgets()
    # Dtype-aware sublane granularity: f32 -> 8, bf16 -> 16, int8/fp8 -> 32.
    sub = max(8, 32 // itemsize)

    if n % _LANE == 0:
        # Sublane/lane-dense path: view the flat buffer as (R, LW), LW a
        # multiple of 128, and tile rows in `sub`-row multiples.
        lw = None
        for cand in (2048, 1024, 512, 256, 128):
            if n % cand == 0 and (n // cand) >= sub:
                lw = cand
                break
        if lw is None:                    # very small inputs: single full block
            lw = max(c for c in (2048, 1024, 512, 256, 128) if n % c == 0)
        r = n // lw

        rows_budget = max((max_block // (lw * itemsize)) // sub * sub, sub)
        tile_r = r if r <= rows_budget else rows_budget   # full extent or k*sub

        xf = jnp.reshape(x2, (r, lw))     # free metadata reshape of the flat slab
        out = _pallas_identity_copy(
            xf,
            grid=(pl.cdiv(r, tile_r),),
            block=(tile_r, lw),
            index_map=lambda i: (i, 0),
            semantics=("parallel",),
            n_bytes=n_bytes,
            vmem_limit=vmem_limit,
        )
        return jnp.reshape(out, (b, d))

    # Fallback: flat size not lane-aligned.  Tile BOTH axes on a 2-D grid so
    # tile_b * tile_d * itemsize <= max_block regardless of batch size.
    if d <= _LANE:
        tile_d = d                        # full-extent lane axis (allowed)
    else:
        tile_d = min((d // _LANE) * _LANE, 2048)   # 128-multiple; edge masked
    rows_budget = max((max_block // (tile_d * itemsize)) // sub * sub, sub)
    tile_b = b if b <= rows_budget else rows_budget     # full extent or k*sub
    return _pallas_identity_copy(
        x2,
        grid=(pl.cdiv(b, tile_b), pl.cdiv(d, tile_d)),
        block=(tile_b, tile_d),
        index_map=lambda i, j: (i, j),
        semantics=("parallel", "parallel"),
        n_bytes=n_bytes,
        vmem_limit=vmem_limit,
    )


if __name__ == "__main__":
    key = jax.random.PRNGKey(0)
    # Small NCHW conv-net style feature map: (B, C, H, W).
    x = jax.random.normal(key, (2, 4, 16, 16), dtype=jnp.float32)
    y_ref = jnp.reshape(x, (x.shape[0], -1))

    # Materialized Pallas copy (exercises the lane-aligned (R, LW) path).
    y = jax.block_until_ready(flatten_layer(x, materialize=True))
    assert y.shape == (2, 4 * 16 * 16)
    assert y.dtype == x.dtype
    assert bool(jnp.array_equal(y, y_ref))

    # bf16 exercises the dtype-aware (16-row) sublane granularity.
    xb = x.astype(jnp.bfloat16)
    yb = jax.block_until_ready(flatten_layer(xb, materialize=True))
    assert bool(jnp.array_equal(yb, jnp.reshape(xb, (2, -1))))

    # Non-128-aligned flat size exercises the 2-D-tiled fallback path.
    x_odd = jax.random.normal(key, (2, 3, 5, 7), dtype=jnp.float32)
    y_odd = jax.block_until_ready(flatten_layer(x_odd, materialize=True))
    assert bool(jnp.array_equal(y_odd, jnp.reshape(x_odd, (2, -1))))

    # Production default: flatten is metadata-only -> free reshape, no kernel.
    y_view = jax.block_until_ready(flatten_layer(x))
    assert bool(jnp.array_equal(y_view, y_ref))

    print("KERNEL_OK")
</pallas_src>

<mosaic_0001>
module attributes {stable_mosaic.version = 11 : i64} {
  func.func @_copy_kernel(%arg0: i32, %arg1: memref<8x256xf32, #tpu.memory_space<vmem>>, %arg2: memref<8x256xf32, #tpu.memory_space<vmem>>) attributes {dimension_semantics = [#tpu.dimension_semantics<parallel>], iteration_bounds = array<i64: 1>, scalar_prefetch = 0 : i64, scratch_operands = 0 : i64, tpu.core_type = #tpu.core_type<tc>, window_params = [{transform_indices = @transform_0, window_bounds = array<i64: 8, 256>}, {transform_indices = @transform_1, window_bounds = array<i64: 8, 256>}]} {
    %c0 = arith.constant 0 : index
    %c0_0 = arith.constant 0 : index
    %0 = vector.load %arg1[%c0, %c0_0] : memref<8x256xf32, #tpu.memory_space<vmem>>, vector<8x256xf32>
    %c0_1 = arith.constant 0 : index
    %c0_2 = arith.constant 0 : index
    %1 = vector.load %arg2[%c0_1, %c0_2] : memref<8x256xf32, #tpu.memory_space<vmem>>, vector<8x256xf32>
    tpu.vector_store %arg2[%c0_1, %c0_2], %0 {strides = array<i32>} : memref<8x256xf32, #tpu.memory_space<vmem>>, vector<8x256xf32>,
    return
  }
  func.func @transform_0(%arg0: i32) -> (i32, i32) {
    %c0_i32 = arith.constant 0 : i32
    %c0_i32_0 = arith.constant 0 : i32
    return %arg0, %c0_i32 : i32, i32
  }
  func.func @transform_1(%arg0: i32) -> (i32, i32) {
    %c0_i32 = arith.constant 0 : i32
    %c0_i32_0 = arith.constant 0 : i32
    return %arg0, %c0_i32 : i32, i32
  }
}

</mosaic_0001>

<llo_original>
// kernel: tpu_custom_call.1
$region0: #{tpu_custom_call.1}
  #allocation0 [shape = 'u32[]', space=smem, size = 0x4, offset = 0x4, fixed_abs, tag = 'smem constant byte address 0x4 - core index']
  #allocation1 [shape = 'u32[144,128]{1,0:T(1,128)}', space=vmem, size = 0x12000, scoped, tag = 'internal scratch']
  %s0 = inlined_call_operand.hbm [shape: f32[8,256], index: 0, kind: input, shape index: {}]
  %s1 = inlined_call_operand.hbm [shape: f32[8,256], index: 1, kind: output, shape index: {}]
  %s2 = sld [smem:[#allocation0]]
  $region18: #{tpu_custom_call.1} parent=0
    _
  %s4 = ssub.s32 1, %s2
  %s5 = scalar_select 0, %s4, %s2
  $region1: #{tpu_custom_call.1} parent=0
    #allocation2 [shape = 'u8[8192]{0}', space=vmem, size = 0x2000, scoped, tag = 'input window, operand 0, single buffered']
    #allocation3 [shape = 's32[1]{0}', space=sflag, size = 0x4, scoped, tag = 'scoped memory for tpu_custom_call.1']
    #allocation4 [shape = 's32[1]{0}', space=sflag, size = 0x4, scoped, tag = 'scoped memory for tpu_custom_call.1']
    #allocation5 [shape = 'u8[8192]{0}', space=vmem, size = 0x2000, scoped, tag = 'output window, operand 0, single buffered']
    %6 = vsyncpa [#allocation3], 0
    %7 = vsyncpa [#allocation4], 0
    // Predicated region
    $region2: #{tpu_custom_call.1} parent=1 // pred_check
      _
    $region3: #{tpu_custom_call.1} parent=1 // pred_check_branch
      %9 = sbr.rel (0) target = $region5
    $region4: #{tpu_custom_call.1} parent=1 // pred_region
      %s11 = ssub.s32 256, 256
      %12 = vsyncadd [#allocation3], %s11
      %s14 = sshll.u32 [#allocation2], 4
      %s15 = int_to_ptr.vmem [resolvable:$true] %s14
      %17 = dma.hbm_to_vmem [thread:$0]  %s0, 256, %s15, [#allocation3]
    $region5: #{tpu_custom_call.1} parent=1 // pred_fallthru
      _
    // Predicated region
    $region6: #{tpu_custom_call.1} parent=1 // pred_check
      _
    $region7: #{tpu_custom_call.1} parent=1 // pred_check_branch
      %19 = sbr.rel (0) target = $region9
    $region8: #{tpu_custom_call.1} parent=1 // pred_region
      %20 = dma.done [#allocation3], 256
    $region9: #{tpu_custom_call.1} parent=1 // pred_fallthru
      _
    %v21 = vld [vmem:[#allocation2] sm:$0xff]
    %v22 = vld [vmem:[#allocation2 + $0x8] sm:$0xff]
    %23 = vst [vmem:[#allocation5] sm:$0xff] %v21
    %24 = vst [vmem:[#allocation5 + $0x8] sm:$0xff] %v22
    // Predicated region
    $region10: #{tpu_custom_call.1} parent=1 // pred_check
      _
    $region11: #{tpu_custom_call.1} parent=1 // pred_check_branch
      %26 = sbr.rel (0) target = $region13
    $region12: #{tpu_custom_call.1} parent=1 // pred_region
      %s28 = ssub.s32 256, 256
      %29 = vsyncadd [#allocation4], %s28
      %s31 = sshll.u32 [#allocation5], 4
      %s32 = int_to_ptr.vmem [resolvable:$true] %s31
      %34 = dma.vmem_to_hbm [thread:$0]  %s32, 256, %s1, [#allocation4]
    $region13: #{tpu_custom_call.1} parent=1 // pred_fallthru
      _
    // Predicated region
    $region14: #{tpu_custom_call.1} parent=1 // pred_check
      _
    $region15: #{tpu_custom_call.1} parent=1 // pred_check_branch
      %36 = sbr.rel (0) target = $region17
    $region16: #{tpu_custom_call.1} parent=1 // pred_region
      %37 = dma.done [#allocation4], 256
    $region17: #{tpu_custom_call.1} parent=1 // pred_fallthru
      _
    %38 = vsyncpa [#allocation3], 1
    %39 = vsyncpa [#allocation4], 1

</llo_original>
